<compile_context>
chip_gen: v7x
topology: tpu7x:2x2x1
jax: 0.10.0
libtpu: 0.0.40
codegen_flags: <defaults>
</compile_context>

<pallas_src>
import functools

import jax
import jax.numpy as jnp
from jax import lax
from jax.experimental import pallas as pl
from jax.experimental.pallas import tpu as pltpu


def _round_up(x: int, m: int) -> int:
    return ((x + m - 1) // m) * m


def _fc_encoder_kernel(x_ref, w_ref, b_ref, o_ref, acc_ref, *, activation,
                       compute_dtype):
    """One (TM, TN) output tile; K reduction along grid axis 2.

    x_ref: (TM, TK)   input rows
    w_ref: (TN, TK)   weight tile in PyTorch (latent, input) layout
    b_ref: (1,  TN)   bias
    o_ref: (TM, TN)   output tile
    acc_ref: (TM, TN) f32 accumulator scratch (persists across K steps)
    """
    k = pl.program_id(2)

    @pl.when(k == 0)
    def _():
        acc_ref[...] = jnp.zeros_like(acc_ref)

    x = x_ref[...].astype(compute_dtype)
    w = w_ref[...].astype(compute_dtype)
    # Contract x(TM,TK) with w(TN,TK) over the K axis of both -> (TM, TN).
    acc_ref[...] += lax.dot_general(
        x, w,
        dimension_numbers=(((1,), (1,)), ((), ())),
        preferred_element_type=jnp.float32,
    )

    @pl.when(k == pl.num_programs(2) - 1)
    def _():
        y = acc_ref[...] + b_ref[...]          # (1, TN) broadcasts over rows
        if activation == "sigmoid":
            y = jax.nn.sigmoid(y)              # EUP transcendental: free slot
        elif activation == "tanh":
            y = jnp.tanh(y)
        elif activation == "relu":
            y = jnp.maximum(y, 0.0)
        # activation in (None, "linear"): identity
        o_ref[...] = y.astype(o_ref.dtype)


@functools.partial(jax.jit, static_argnames=("activation", "compute_dtype"))
def fc_encoder(x, weight, bias, activation=None, *,
               compute_dtype=jnp.bfloat16):
    """Pallas equivalent of FcEncoder.forward.

    x:      (batch, input_dim) float32
    weight: (latent_dim, input_dim) float32   (PyTorch nn.Linear layout)
    bias:   (latent_dim,) float32
    """
    if activation in ("leaky_relu", "elu"):
        raise ValueError(f"{activation} is not supported by GAP9")

    batch, input_dim = x.shape
    latent_dim, in_dim_w = weight.shape
    assert in_dim_w == input_dim, "weight must be (latent_dim, input_dim)"
    assert bias.shape == (latent_dim,)

    # Tile sizes: MXU-shaped (<=256x256 output tiles), K tiled at <=512.
    # TM multiple of 8 (sublanes), TN/TK multiples of 128 (lanes).
    TM = min(_round_up(batch, 8), 256)
    TN = min(_round_up(latent_dim, 128), 256)
    TK = min(_round_up(input_dim, 128), 512)

    # Pad to tile multiples (zero padding along K is exact; extra rows/cols
    # are sliced off after the call).
    Mp = _round_up(batch, TM)
    Np = _round_up(latent_dim, TN)
    Kp = _round_up(input_dim, TK)

    x_p = x
    if (Mp, Kp) != (batch, input_dim):
        x_p = jnp.pad(x, ((0, Mp - batch), (0, Kp - input_dim)))
    w_p = weight
    if (Np, Kp) != (latent_dim, input_dim):
        w_p = jnp.pad(weight, ((0, Np - latent_dim), (0, Kp - input_dim)))
    b_p = bias if Np == latent_dim else jnp.pad(bias, (0, Np - latent_dim))
    b2d = b_p.reshape(1, Np)

    grid = (Mp // TM, Np // TN, Kp // TK)

    # Explicit VMEM budget with headroom (double-buffered inputs/outputs +
    # accumulator scratch); clamp well below v7x's 64 MiB physical VMEM.
    bytes_f32 = 4
    needed = 2 * (TM * TK + TN * TK + TN + TM * TN) * bytes_f32 \
        + TM * TN * bytes_f32
    vmem_limit = min(max(2 * needed, 16 * 1024 * 1024), 48 * 1024 * 1024)

    kernel = functools.partial(
        _fc_encoder_kernel, activation=activation, compute_dtype=compute_dtype)

    out = pl.pallas_call(
        kernel,
        out_shape=jax.ShapeDtypeStruct((Mp, Np), x.dtype),
        grid_spec=pltpu.PrefetchScalarGridSpec(
            num_scalar_prefetch=0,
            grid=grid,
            in_specs=[
                pl.BlockSpec((TM, TK), lambda i, j, k: (i, k)),   # x
                pl.BlockSpec((TN, TK), lambda i, j, k: (j, k)),   # weight
                pl.BlockSpec((1, TN), lambda i, j, k: (0, j)),    # bias
            ],
            out_specs=pl.BlockSpec((TM, TN), lambda i, j, k: (i, j)),
            scratch_shapes=[pltpu.VMEM((TM, TN), jnp.float32)],
        ),
        compiler_params=pltpu.CompilerParams(
            dimension_semantics=("parallel", "parallel", "arbitrary"),
            vmem_limit_bytes=vmem_limit,
        ),
    )(x_p, w_p, b2d)

    return out[:batch, :latent_dim]


def _reference(x, weight, bias, activation):
    y = x @ weight.T + bias
    if activation == "sigmoid":
        y = jax.nn.sigmoid(y)
    elif activation == "tanh":
        y = jnp.tanh(y)
    elif activation == "relu":
        y = jnp.maximum(y, 0.0)
    return y


def _run_case(batch, input_dim, latent_dim, key):
    kx, kw, kb = jax.random.split(key, 3)
    x = jax.random.normal(kx, (batch, input_dim), dtype=jnp.float32)
    bound = 1.0 / jnp.sqrt(jnp.float32(input_dim))
    weight = jax.random.uniform(
        kw, (latent_dim, input_dim), minval=-bound, maxval=bound,
        dtype=jnp.float32)
    bias = jax.random.uniform(
        kb, (latent_dim,), minval=-bound, maxval=bound, dtype=jnp.float32)

    ok = True
    for act in (None, "linear", "sigmoid", "tanh", "relu"):
        ref = _reference(x, weight, bias, act)
        # bf16 MXU path (default): loose tolerance vs. f32 reference.
        out_bf16 = jax.block_until_ready(
            fc_encoder(x, weight, bias, activation=act,
                       compute_dtype=jnp.bfloat16))
        if not jnp.allclose(out_bf16, ref, atol=5e-2, rtol=5e-2):
            ok = False
            print(f"MISMATCH (bf16) shape=({batch},{input_dim},{latent_dim}) "
                  f"activation={act}")
        # f32 path: tight tolerance.
        out_f32 = jax.block_until_ready(
            fc_encoder(x, weight, bias, activation=act,
                       compute_dtype=jnp.float32))
        if not jnp.allclose(out_f32, ref, atol=1e-5, rtol=1e-5):
            ok = False
            print(f"MISMATCH (f32) shape=({batch},{input_dim},{latent_dim}) "
                  f"activation={act}")
    return ok


if __name__ == "__main__":
    key = jax.random.PRNGKey(0)
    k1, k2 = jax.random.split(key)

    ok = True
    # Small shape matching the module's typical use (batch=8, 32 -> 16).
    ok &= _run_case(batch=8, input_dim=32, latent_dim=16, key=k1)
    # Larger shape exercising multi-tile N and K-axis accumulation.
    ok &= _run_case(batch=144, input_dim=640, latent_dim=272, key=k2)

    if ok:
        print("KERNEL_OK")
</pallas_src>

<mosaic_0001>
module attributes {stable_mosaic.version = 11 : i64} {
  func.func @_fc_encoder_kernel(%arg0: i32, %arg1: i32, %arg2: i32, %arg3: memref<8x128xf32, #tpu.memory_space<vmem>>, %arg4: memref<128x128xf32, #tpu.memory_space<vmem>>, %arg5: memref<1x128xf32, #tpu.memory_space<vmem>>, %arg6: memref<8x128xf32, #tpu.memory_space<vmem>>, %arg7: memref<8x128xf32, #tpu.memory_space<vmem>>) attributes {dimension_semantics = [#tpu.dimension_semantics<parallel>, #tpu.dimension_semantics<parallel>, #tpu.dimension_semantics<arbitrary>], iteration_bounds = array<i64: 1, 1, 1>, scalar_prefetch = 0 : i64, scratch_operands = 1 : i64, tpu.core_type = #tpu.core_type<tc>, window_params = [{transform_indices = @transform_0, window_bounds = array<i64: 8, 128>}, {transform_indices = @transform_1, window_bounds = array<i64: 128, 128>}, {transform_indices = @transform_2, window_bounds = array<i64: 1, 128>}, {transform_indices = @transform_3, window_bounds = array<i64: 8, 128>}]} {
    %c0_i32 = arith.constant 0 : i32
    %0 = arith.cmpi eq, %arg2, %c0_i32 : i32
    %1 = arith.extui %0 : i1 to i32
    %c0_i32_0 = arith.constant 0 : i32
    %2 = arith.cmpi ne, %1, %c0_i32_0 : i32
    scf.if %2 {
      %cst_10 = arith.constant 0.000000e+00 : f32
      %14 = vector.broadcast %cst_10 : f32 to vector<8x128xf32>
      %c0_11 = arith.constant 0 : index
      %c0_12 = arith.constant 0 : index
      %15 = vector.load %arg7[%c0_11, %c0_12] : memref<8x128xf32, #tpu.memory_space<vmem>>, vector<8x128xf32>
      tpu.vector_store %arg7[%c0_11, %c0_12], %14 {strides = array<i32>} : memref<8x128xf32, #tpu.memory_space<vmem>>, vector<8x128xf32>,
    } else {
    }
    %c0 = arith.constant 0 : index
    %c0_1 = arith.constant 0 : index
    %3 = vector.load %arg3[%c0, %c0_1] : memref<8x128xf32, #tpu.memory_space<vmem>>, vector<8x128xf32>
    %4 = arith.truncf %3 : vector<8x128xf32> to vector<8x128xbf16>
    %c0_2 = arith.constant 0 : index
    %c0_3 = arith.constant 0 : index
    %5 = vector.load %arg4[%c0_2, %c0_3] : memref<128x128xf32, #tpu.memory_space<vmem>>, vector<128x128xf32>
    %6 = arith.truncf %5 : vector<128x128xf32> to vector<128x128xbf16>
    %c0_4 = arith.constant 0 : index
    %c0_5 = arith.constant 0 : index
    %7 = vector.load %arg7[%c0_4, %c0_5] : memref<8x128xf32, #tpu.memory_space<vmem>>, vector<8x128xf32>
    %cst = arith.constant dense<0.000000e+00> : vector<8x128xf32>
    %8 = tpu.matmul %4, %6, %cst {dimension_numbers = #tpu.dot_dimension_numbers<[1], [1], [0], [0], [0, 0, 1, 0], [], []>} : vector<8x128xbf16>, vector<128x128xbf16>, vector<8x128xf32> -> vector<8x128xf32>
    %9 = arith.addf %7, %8 : vector<8x128xf32>
    %c0_6 = arith.constant 0 : index
    %c0_7 = arith.constant 0 : index
    %10 = vector.load %arg7[%c0_6, %c0_7] : memref<8x128xf32, #tpu.memory_space<vmem>>, vector<8x128xf32>
    tpu.vector_store %arg7[%c0_6, %c0_7], %9 {strides = array<i32>} : memref<8x128xf32, #tpu.memory_space<vmem>>, vector<8x128xf32>,
    %c0_i32_8 = arith.constant 0 : i32
    %11 = arith.cmpi eq, %arg2, %c0_i32_8 : i32
    %12 = arith.extui %11 : i1 to i32
    %c0_i32_9 = arith.constant 0 : i32
    %13 = arith.cmpi ne, %12, %c0_i32_9 : i32
    scf.if %13 {
      %c0_10 = arith.constant 0 : index
      %c0_11 = arith.constant 0 : index
      %14 = vector.load %arg7[%c0_10, %c0_11] : memref<8x128xf32, #tpu.memory_space<vmem>>, vector<8x128xf32>
      %c0_12 = arith.constant 0 : index
      %c0_13 = arith.constant 0 : index
      %15 = vector.load %arg5[%c0_12, %c0_13] : memref<1x128xf32, #tpu.memory_space<vmem>>, vector<1x128xf32>
      %16 = vector.broadcast %15 : vector<1x128xf32> to vector<8x128xf32>
      %17 = arith.addf %14, %16 : vector<8x128xf32>
      %c0_14 = arith.constant 0 : index
      %c0_15 = arith.constant 0 : index
      %18 = vector.load %arg6[%c0_14, %c0_15] : memref<8x128xf32, #tpu.memory_space<vmem>>, vector<8x128xf32>
      tpu.vector_store %arg6[%c0_14, %c0_15], %17 {strides = array<i32>} : memref<8x128xf32, #tpu.memory_space<vmem>>, vector<8x128xf32>,
    } else {
    }
    return
  }
  func.func @transform_0(%arg0: i32, %arg1: i32, %arg2: i32) -> (i32, i32) {
    %c0_i32 = arith.constant 0 : i32
    return %arg0, %arg2 : i32, i32
  }
  func.func @transform_1(%arg0: i32, %arg1: i32, %arg2: i32) -> (i32, i32) {
    %c0_i32 = arith.constant 0 : i32
    return %arg1, %arg2 : i32, i32
  }
  func.func @transform_2(%arg0: i32, %arg1: i32, %arg2: i32) -> (i32, i32) {
    %c0_i32 = arith.constant 0 : i32
    %c0_i32_0 = arith.constant 0 : i32
    return %c0_i32, %arg1 : i32, i32
  }
  func.func @transform_3(%arg0: i32, %arg1: i32, %arg2: i32) -> (i32, i32) {
    %c0_i32 = arith.constant 0 : i32
    return %arg0, %arg1 : i32, i32
  }
}

</mosaic_0001>

<llo_original>
// kernel: fc_encoder.1
$region0: #{fc_encoder.1}
  #allocation0 [shape = 'u32[]', space=smem, size = 0x4, offset = 0x4, fixed_abs, tag = 'smem constant byte address 0x4 - core index']
  #allocation1 [shape = 'u32[144,128]{1,0:T(1,128)}', space=vmem, size = 0x12000, scoped, tag = 'internal scratch']
  #allocation2 [shape = 'f32[8,128]{1,0:T(8,128)}', space=vmem, size = 0x1000, scoped, tag = 'scratch operand']
  %s0 = inlined_call_operand.vmem [shape: f32[8,128], index: 0, kind: input, shape index: {}]
  %s1 = inlined_call_operand.vmem [shape: f32[128,128], index: 1, kind: input, shape index: {}]
  %s2 = inlined_call_operand.vmem [shape: f32[1,128], index: 2, kind: input, shape index: {}]
  %s3 = inlined_call_operand.hbm [shape: f32[8,128], index: 3, kind: output, shape index: {}]
  %s4 = sld [smem:[#allocation0]]
  $region30: #{fc_encoder.1} parent=0
    _
  %s6 = ssub.s32 1, %s4
  %s7 = scalar_select 0, %s6, %s4
  $region1: #{fc_encoder.1} parent=0
    #allocation3 [shape = 'u8[4096]{0}', space=vmem, size = 0x1000, scoped, tag = 'output window, operand 0, single buffered']
    #allocation4 [shape = 's32[1]{0}', space=sflag, size = 0x4, scoped, tag = 'scoped memory for fc_encoder.1']
    %8 = vsyncpa [#allocation4], 0
    // Predicated region
    $region2: #{fc_encoder.1} parent=1 // pred_check
      _
    $region3: #{fc_encoder.1} parent=1 // pred_check_branch
      %10 = sbr.rel (0) target = $region5
    $region4: #{fc_encoder.1} parent=1 // pred_region
      _
    $region5: #{fc_encoder.1} parent=1 // pred_fallthru
      _
    // Predicated region
    $region6: #{fc_encoder.1} parent=1 // pred_check
      _
    $region7: #{fc_encoder.1} parent=1 // pred_check_branch
      %12 = sbr.rel (0) target = $region9
    $region8: #{fc_encoder.1} parent=1 // pred_region
      _
    $region9: #{fc_encoder.1} parent=1 // pred_fallthru
      _
    // Predicated region
    $region10: #{fc_encoder.1} parent=1 // pred_check
      _
    $region11: #{fc_encoder.1} parent=1 // pred_check_branch
      %14 = sbr.rel (0) target = $region13
    $region12: #{fc_encoder.1} parent=1 // pred_region
      _
    $region13: #{fc_encoder.1} parent=1 // pred_fallthru
      _
    %p16 = scmp.eq.s32.totalorder 0, 0
    // Predicated region
    $region14: #{fc_encoder.1} parent=1 // pred_check
      %p17 = pneg %p16
    $region15: #{fc_encoder.1} parent=1 // pred_check_branch
      %19 = sbr.rel (%p17) target = $region17
    $region16: #{fc_encoder.1} parent=1 // pred_region
      %20 = vst [vmem:[#allocation2] sm:$0xff] 0.0
    $region17: #{fc_encoder.1} parent=1 // pred_fallthru
      _
    %v21 = vld [vmem:[%s0] sm:$0xff]
    %v22 = vpack.c.bf16 %v21, %v21
    %v23 = vld [vmem:[%s1] sm:$0xff]
    %v24 = vld [vmem:[%s1 + $0x8] sm:$0xff]
    %v25 = vld [vmem:[%s1 + $0x10] sm:$0xff]
    %v26 = vld [vmem:[%s1 + $0x18] sm:$0xff]
    %v27 = vld [vmem:[%s1 + $0x20] sm:$0xff]
    %v28 = vld [vmem:[%s1 + $0x28] sm:$0xff]
    %v29 = vld [vmem:[%s1 + $0x30] sm:$0xff]
    %v30 = vld [vmem:[%s1 + $0x38] sm:$0xff]
    %v31 = vld [vmem:[%s1 + $0x40] sm:$0xff]
    %v32 = vld [vmem:[%s1 + $0x48] sm:$0xff]
    %v33 = vld [vmem:[%s1 + $0x50] sm:$0xff]
    %v34 = vld [vmem:[%s1 + $0x58] sm:$0xff]
    %v35 = vld [vmem:[%s1 + $0x60] sm:$0xff]
    %v36 = vld [vmem:[%s1 + $0x68] sm:$0xff]
    %v37 = vld [vmem:[%s1 + $0x70] sm:$0xff]
    %v38 = vld [vmem:[%s1 + $0x78] sm:$0xff]
    %v39 = vpack.c.bf16 %v24, %v23
    %v40 = vpack.c.bf16 %v26, %v25
    %v41 = vpack.c.bf16 %v28, %v27
    %v42 = vpack.c.bf16 %v30, %v29
    %v43 = vpack.c.bf16 %v32, %v31
    %v44 = vpack.c.bf16 %v34, %v33
    %v45 = vpack.c.bf16 %v36, %v35
    %v46 = vpack.c.bf16 %v38, %v37
    %v47 = vld [vmem:[#allocation2] sm:$0xff]
    %48 = vmatprep.subr.bf16.mxu0 0
    %49 = vmatpush1.bf16.xpose.msra.mxu0 %v39
    %50 = vmatprep.subr.bf16.mxu0 0
    %51 = vmatpush1.bf16.xpose.msra.mxu0 %v40
    %52 = vmatprep.subr.bf16.mxu0 0
    %53 = vmatpush1.bf16.xpose.msra.mxu0 %v41
    %54 = vmatprep.subr.bf16.mxu0 0
    %55 = vmatpush1.bf16.xpose.msra.mxu0 %v42
    %56 = vmatprep.subr.bf16.mxu0 0
    %57 = vmatpush1.bf16.xpose.msra.mxu0 %v43
    %58 = vmatprep.subr.bf16.mxu0 0
    %59 = vmatpush1.bf16.xpose.msra.mxu0 %v44
    %60 = vmatprep.subr.bf16.mxu0 0
    %61 = vmatpush1.bf16.xpose.msra.mxu0 %v45
    %62 = vmatprep.subr.bf16.mxu0 0
    %63 = vmatpush1.bf16.xpose.msra.mxu0 %v46
    %64 = vmatprep.subr.bf16.mxu0 0
    %65 = vmatpush1.bf16.xpose.msra.mxu0 0
    %66 = vmatprep.subr.bf16.mxu0 0
    %67 = vmatpush1.bf16.xpose.msra.mxu0 0
    %68 = vmatprep.subr.bf16.mxu0 0
    %69 = vmatpush1.bf16.xpose.msra.mxu0 0
    %70 = vmatprep.subr.bf16.mxu0 0
    %71 = vmatpush1.bf16.xpose.msra.mxu0 0
    %72 = vmatprep.subr.bf16.mxu0 0
    %73 = vmatpush1.bf16.xpose.msra.mxu0 0
    %74 = vmatprep.subr.bf16.mxu0 0
    %75 = vmatpush1.bf16.xpose.msra.mxu0 0
    %76 = vmatprep.subr.bf16.mxu0 0
    %77 = vmatpush1.bf16.xpose.msra.mxu0 0
    %78 = vmatprep.subr.bf16.mxu0 0
    %79 = vmatpush1.bf16.xpose.msra.mxu0 0
    %80 = vmatprep.mubr.bf16.mxu0 0
    %81 = vmatmul.mubr.bf16.gmra.mrb[0].mxu0 %v22
    %v82 = vpop.f32.mrb[0].mxu0
    %v83 = vadd.f32 0.0, %v82
    %v84 = vpop.f32.mrb[0].mxu0
    %v85 = vpop.f32.mrb[0].mxu0
    %v86 = vpop.f32.mrb[0].mxu0
    %87 = vdwg.mxu0
    %v88 = vadd.f32 %v47, %v83
    %89 = vst [vmem:[#allocation2] sm:$0xff] %v88
    // Predicated region
    $region18: #{fc_encoder.1} parent=1 // pred_check
      %p90 = pneg %p16
    $region19: #{fc_encoder.1} parent=1 // pred_check_branch
      %92 = sbr.rel (%p90) target = $region21
    $region20: #{fc_encoder.1} parent=1 // pred_region
      %v93 = vld [vmem:[#allocation2] sm:$0xff]
      %v94 = vld [vmem:[%s2] sm:$0x1]
      %v96 = vlaneseq
      %v97 = vshrl.u32 %v96, 7
      %v98 = vsub.s32 0, %v97
      %v99 = vrot.slane %v94, %v98
      %v101 = vadd.f32 %v93, %v99
      %102 = vst [vmem:[#allocation3] sm:$0xff] %v101
    $region21: #{fc_encoder.1} parent=1 // pred_fallthru
      _
    // Predicated region
    $region22: #{fc_encoder.1} parent=1 // pred_check
      _
    $region23: #{fc_encoder.1} parent=1 // pred_check_branch
      %104 = sbr.rel (0) target = $region25
    $region24: #{fc_encoder.1} parent=1 // pred_region
      %s106 = ssub.s32 128, 128
      %107 = vsyncadd [#allocation4], %s106
      %s109 = sshll.u32 [#allocation3], 4
      %s110 = int_to_ptr.vmem [resolvable:$true] %s109
      %112 = dma.vmem_to_hbm [thread:$0]  %s110, 128, %s3, [#allocation4]
    $region25: #{fc_encoder.1} parent=1 // pred_fallthru
      _
    // Predicated region
    $region26: #{fc_encoder.1} parent=1 // pred_check
      _
    $region27: #{fc_encoder.1} parent=1 // pred_check_branch
      %114 = sbr.rel (0) target = $region29
    $region28: #{fc_encoder.1} parent=1 // pred_region
      %115 = dma.done [#allocation4], 128
    $region29: #{fc_encoder.1} parent=1 // pred_fallthru
      _
    %116 = vsyncpa [#allocation4], 1

</llo_original>
